<compile_context>
chip_gen: v5e
topology: v5e:2x2
jax: 0.10.0
libtpu: 0.0.40
codegen_flags: <defaults>
</compile_context>

<pallas_src>
import functools
import math

import jax
import jax.numpy as jnp
from jax.experimental import pallas as pl
from jax.experimental.pallas import tpu as pltpu


def _weighted_prompt_kernel(w_ref, g_ref, o_ref, *, weightednum):
    # w_ref: (1, K) f32 in SMEM  -> each w_ref[0, k] is a cheap scalar load.
    # g_ref: (K, TILE_D) f32 in VMEM (one lane-dense tile of the embedding).
    # o_ref: (1, TILE_D) f32 in VMEM.
    #
    # K is tiny (number of prompts being mixed), so unroll the weighted sum on
    # the VPU instead of pushing a degenerate matmul through the MXU: each term
    # is a scalar-broadcast multiply-add in the VALU slots, f32 throughout.
    g = g_ref[...]                                  # (K, TILE_D) f32
    acc = w_ref[0, 0] * g[0:1, :]                   # (1, TILE_D) f32
    for k in range(1, weightednum):                 # static Python unroll
        acc = acc + w_ref[0, k] * g[k : k + 1, :]
    o_ref[...] = acc                                # already f32, no cast


def _pick_tile_d(d, max_tile=2048):
    """Largest lane-dense tile (multiple of 128) dividing d, else full d."""
    if d % 128 == 0:
        cand = max_tile
        while cand >= 128:
            if d % cand == 0:
                return cand
            cand //= 2
    return d  # full-array block (legal since block dim == array dim)


def weighted_prompt_forward(weight, graph_embedding):
    """weight: (1, K) f32, graph_embedding: (K, D) f32 -> (1, D) f32."""
    one, k = weight.shape
    k2, d = graph_embedding.shape
    assert one == 1 and k == k2

    tile_d = _pick_tile_d(d)
    grid = (d // tile_d,)

    kernel = functools.partial(_weighted_prompt_kernel, weightednum=k)

    return pl.pallas_call(
        kernel,
        out_shape=jax.ShapeDtypeStruct((1, d), jnp.float32),
        grid=grid,
        in_specs=[
            # Tiny (1, K) weight sits in SMEM so w[0, k] reads are scalar loads
            # that broadcast over the lane-dense tile on the VPU.
            pl.BlockSpec(memory_space=pltpu.MemorySpace.SMEM),
            # graph_embedding tiled along D (lane axis), full K per tile.
            pl.BlockSpec((k, tile_d), lambda j: (0, j)),
        ],
        out_specs=pl.BlockSpec((1, tile_d), lambda j: (0, j)),
        compiler_params=pltpu.CompilerParams(
            # Independent D tiles: lets v7x shard the grid across its 2 TCs.
            dimension_semantics=("parallel",),
        ),
    )(weight, graph_embedding)


def make_weight(weightednum, key):
    """Deterministic re-implementation of the module's reset_parameters()."""
    # xavier_uniform_ on shape (1, weightednum): fan_in = weightednum, fan_out = 1
    fan_in, fan_out = weightednum, 1
    bound = math.sqrt(6.0 / (fan_in + fan_out))
    w = jax.random.uniform(
        key, (1, weightednum), dtype=jnp.float32, minval=-bound, maxval=bound
    )
    # weight[0][0] = 0.9, weight[0][1] = 0.9, weight[0][2] = 0.1
    w = w.at[0, 0].set(0.9)
    w = w.at[0, 1].set(0.9)
    w = w.at[0, 2].set(0.1)
    return w


if __name__ == "__main__":
    key = jax.random.PRNGKey(0)
    k_w, k_g1, k_g2 = jax.random.split(key, 3)

    weightednum = 4   # number of prompts being weighted
    hidden = 32       # embedding dimension (module-default small shape)

    weight = make_weight(weightednum, k_w)

    # Small shape consistent with the module: single full-array block.
    g_small = jax.random.normal(k_g1, (weightednum, hidden), dtype=jnp.float32)
    out_small = jax.block_until_ready(weighted_prompt_forward(weight, g_small))
    ref_small = weight @ g_small
    assert out_small.shape == (1, hidden)
    assert jnp.allclose(out_small, ref_small, atol=1e-5, rtol=1e-5)

    # Larger, lane-dense D to exercise the tiled / parallel-grid path.
    hidden_big = 4096
    g_big = jax.random.normal(k_g2, (weightednum, hidden_big), dtype=jnp.float32)
    out_big = jax.block_until_ready(weighted_prompt_forward(weight, g_big))
    ref_big = weight @ g_big
    assert out_big.shape == (1, hidden_big)
    assert jnp.allclose(out_big, ref_big, atol=1e-5, rtol=1e-5)

    print("KERNEL_OK")
</pallas_src>

<mosaic_0001>
module attributes {stable_mosaic.version = 11 : i64} {
  func.func @_weighted_prompt_kernel(%arg0: i32, %arg1: memref<1x4xf32, #tpu.memory_space<smem>>, %arg2: memref<4x32xf32, #tpu.memory_space<vmem>>, %arg3: memref<1x32xf32, #tpu.memory_space<vmem>>) attributes {dimension_semantics = [#tpu.dimension_semantics<parallel>], iteration_bounds = array<i64: 1>, scalar_prefetch = 0 : i64, scratch_operands = 0 : i64, tpu.core_type = #tpu.core_type<tc>, window_params = [{transform_indices = @transform_0, window_bounds = array<i64: 1, 4>}, {transform_indices = @transform_1, window_bounds = array<i64: 4, 32>}, {transform_indices = @transform_2, window_bounds = array<i64: 1, 32>}]} {
    %c0 = arith.constant 0 : index
    %c0_0 = arith.constant 0 : index
    %0 = vector.load %arg2[%c0, %c0_0] : memref<4x32xf32, #tpu.memory_space<vmem>>, vector<4x32xf32>
    %c0_1 = arith.constant 0 : index
    %c0_2 = arith.constant 0 : index
    %1 = memref.load %arg1[%c0_1, %c0_2] : memref<1x4xf32, #tpu.memory_space<smem>>
    %2 = vector.extract_strided_slice %0 {offsets = [0, 0], sizes = [1, 32], strides = [1, 1]} : vector<4x32xf32> to vector<1x32xf32>
    %3 = vector.broadcast %1 : f32 to vector<1x32xf32>
    %4 = arith.mulf %3, %2 : vector<1x32xf32>
    %c0_3 = arith.constant 0 : index
    %c1 = arith.constant 1 : index
    %5 = memref.load %arg1[%c0_3, %c1] : memref<1x4xf32, #tpu.memory_space<smem>>
    %6 = vector.extract_strided_slice %0 {offsets = [1, 0], sizes = [1, 32], strides = [1, 1]} : vector<4x32xf32> to vector<1x32xf32>
    %7 = vector.broadcast %5 : f32 to vector<1x32xf32>
    %8 = arith.mulf %7, %6 : vector<1x32xf32>
    %9 = arith.addf %4, %8 : vector<1x32xf32>
    %c0_4 = arith.constant 0 : index
    %c2 = arith.constant 2 : index
    %10 = memref.load %arg1[%c0_4, %c2] : memref<1x4xf32, #tpu.memory_space<smem>>
    %11 = vector.extract_strided_slice %0 {offsets = [2, 0], sizes = [1, 32], strides = [1, 1]} : vector<4x32xf32> to vector<1x32xf32>
    %12 = vector.broadcast %10 : f32 to vector<1x32xf32>
    %13 = arith.mulf %12, %11 : vector<1x32xf32>
    %14 = arith.addf %9, %13 : vector<1x32xf32>
    %c0_5 = arith.constant 0 : index
    %c3 = arith.constant 3 : index
    %15 = memref.load %arg1[%c0_5, %c3] : memref<1x4xf32, #tpu.memory_space<smem>>
    %16 = vector.extract_strided_slice %0 {offsets = [3, 0], sizes = [1, 32], strides = [1, 1]} : vector<4x32xf32> to vector<1x32xf32>
    %17 = vector.broadcast %15 : f32 to vector<1x32xf32>
    %18 = arith.mulf %17, %16 : vector<1x32xf32>
    %19 = arith.addf %14, %18 : vector<1x32xf32>
    %c0_6 = arith.constant 0 : index
    %c0_7 = arith.constant 0 : index
    %20 = vector.load %arg3[%c0_6, %c0_7] : memref<1x32xf32, #tpu.memory_space<vmem>>, vector<1x32xf32>
    tpu.vector_store %arg3[%c0_6, %c0_7], %19 {strides = array<i32>} : memref<1x32xf32, #tpu.memory_space<vmem>>, vector<1x32xf32>,
    return
  }
  func.func @transform_0(%arg0: i32) -> (i32, i32) {
    %c0_i32 = arith.constant 0 : i32
    %c0_i32_0 = arith.constant 0 : i32
    %c0_i32_1 = arith.constant 0 : i32
    return %c0_i32, %c0_i32_0 : i32, i32
  }
  func.func @transform_1(%arg0: i32) -> (i32, i32) {
    %c0_i32 = arith.constant 0 : i32
    %c0_i32_0 = arith.constant 0 : i32
    return %c0_i32, %arg0 : i32, i32
  }
  func.func @transform_2(%arg0: i32) -> (i32, i32) {
    %c0_i32 = arith.constant 0 : i32
    %c0_i32_0 = arith.constant 0 : i32
    return %c0_i32, %arg0 : i32, i32
  }
}

</mosaic_0001>

<llo_original>
// kernel: tpu_custom_call.1
$region0: #{tpu_custom_call.1}
  #allocation0 [shape = 'u32[]', space=smem, size = 0x4, offset = 0x4, fixed_abs, tag = 'smem constant byte address 0x4 - core index']
  #allocation1 [shape = 'u32[72,128]{1,0:T(1,128)}', space=vmem, size = 0x9000, scoped, tag = 'internal scratch']
  %s0 = inlined_call_operand.hbm [shape: f32[1,4], index: 0, kind: input, shape index: {}]
  %s1 = inlined_call_operand.hbm [shape: f32[4,32], index: 1, kind: input, shape index: {}]
  %s2 = inlined_call_operand.hbm [shape: f32[1,32], index: 2, kind: output, shape index: {}]
  %s3 = sld [smem:[#allocation0]]
  $region26: #{tpu_custom_call.1} parent=0
    _
  %s5 = ssub.s32 1, %s3
  %s6 = scalar_select 0, %s5, %s3
  $region1: #{tpu_custom_call.1} parent=0
    #allocation2 [shape = 'u8[512]{0}', space=smem, size = 0x200, scoped, tag = 'input window, operand 0, single buffered']
    #allocation3 [shape = 's32[1]{0}', space=sflag, size = 0x4, scoped, tag = 'scoped memory for tpu_custom_call.1']
    #allocation4 [shape = 's32[1]{0}', space=sflag, size = 0x4, scoped, tag = 'scoped memory for tpu_custom_call.1']
    #allocation5 [shape = 's32[1]{0}', space=sflag, size = 0x4, scoped, tag = 'scoped memory for tpu_custom_call.1']
    #allocation6 [shape = 'u8[2048]{0}', space=vmem, size = 0x800, scoped, tag = 'input window, operand 1, single buffered']
    #allocation7 [shape = 'u8[512]{0}', space=vmem, size = 0x400, scoped, tag = 'output window, operand 0, single buffered']
    %7 = vsyncpa [#allocation5], 0
    %8 = vsyncpa [#allocation3], 0
    %9 = vsyncpa [#allocation4], 0
    // Predicated region
    $region2: #{tpu_custom_call.1} parent=1 // pred_check
      _
    $region3: #{tpu_custom_call.1} parent=1 // pred_check_branch
      %11 = sbr.rel (0) target = $region5
    $region4: #{tpu_custom_call.1} parent=1 // pred_region
      %13 = vsyncadd [#allocation5], 0
      %s15 = sshll.u32 %s0, 4
      %s16 = int_to_ptr.hbm [resolvable:$true] %s15
      %18 = dma.hbm_to_smem %s16, 16, [#allocation2], [#allocation5]
    $region5: #{tpu_custom_call.1} parent=1 // pred_fallthru
      _
    // Predicated region
    $region6: #{tpu_custom_call.1} parent=1 // pred_check
      _
    $region7: #{tpu_custom_call.1} parent=1 // pred_check_branch
      %20 = sbr.rel (0) target = $region9
    $region8: #{tpu_custom_call.1} parent=1 // pred_region
      %22 = vsyncadd [#allocation3], 0
      %s24 = sshll.u32 %s1, 4
      %s25 = int_to_ptr.hbm [resolvable:$true] %s24
      %s26 = sshll.u32 [#allocation6], 4
      %s27 = int_to_ptr.vmem [resolvable:$true] %s26
      %29 = dma.hbm_to_vmem [thread:$0]  %s25, 64, %s27, [#allocation3]
    $region9: #{tpu_custom_call.1} parent=1 // pred_fallthru
      _
    // Predicated region
    $region10: #{tpu_custom_call.1} parent=1 // pred_check
      _
    $region11: #{tpu_custom_call.1} parent=1 // pred_check_branch
      %31 = sbr.rel (0) target = $region13
    $region12: #{tpu_custom_call.1} parent=1 // pred_region
      %33 = dma.done [#allocation5], 16
    $region13: #{tpu_custom_call.1} parent=1 // pred_fallthru
      _
    // Predicated region
    $region14: #{tpu_custom_call.1} parent=1 // pred_check
      _
    $region15: #{tpu_custom_call.1} parent=1 // pred_check_branch
      %35 = sbr.rel (0) target = $region17
    $region16: #{tpu_custom_call.1} parent=1 // pred_region
      %37 = dma.done [#allocation3], 64
    $region17: #{tpu_custom_call.1} parent=1 // pred_fallthru
      _
    %38 = sfence
    %v39 = vld [vmem:[#allocation6] sm:$0xf]
    %s40 = sld [smem:[#allocation2]]
    %v41 = vstv %s40
    %v42 = vmul.f32 %v41, %v39
    %s43 = sld [smem:[#allocation2 + $0x1]]
    %v44 = vstv %s43
    %v45 = vmul.f32 %v44, %v39
    %v47 = vrot.slane %v45, 1
    %v49 = vadd.f32 %v42, %v47
    %s50 = sld [smem:[#allocation2 + $0x2]]
    %v51 = vstv %s50
    %v52 = vmul.f32 %v51, %v39
    %v54 = vrot.slane %v52, 2
    %v56 = vadd.f32 %v49, %v54
    %s57 = sld [smem:[#allocation2 + $0x3]]
    %v58 = vstv %s57
    %v59 = vmul.f32 %v58, %v39
    %v61 = vrot.slane %v59, 3
    %v63 = vadd.f32 %v56, %v61
    %vm64 = vcmask 253952
    %65 = vst.msk [vmem:[#allocation7] sm:$0x1] %vm64, %v63
    // Predicated region
    $region18: #{tpu_custom_call.1} parent=1 // pred_check
      _
    $region19: #{tpu_custom_call.1} parent=1 // pred_check_branch
      %67 = sbr.rel (0) target = $region21
    $region20: #{tpu_custom_call.1} parent=1 // pred_region
      %69 = vsyncadd [#allocation4], 0
      %s71 = sshll.u32 [#allocation7], 4
      %s72 = int_to_ptr.vmem [resolvable:$true] %s71
      %s73 = sshll.u32 %s2, 4
      %s74 = int_to_ptr.hbm [resolvable:$true] %s73
      %76 = dma.vmem_to_hbm [thread:$0]  %s72, 16, %s74, [#allocation4]
    $region21: #{tpu_custom_call.1} parent=1 // pred_fallthru
      _
    // Predicated region
    $region22: #{tpu_custom_call.1} parent=1 // pred_check
      _
    $region23: #{tpu_custom_call.1} parent=1 // pred_check_branch
      %78 = sbr.rel (0) target = $region25
    $region24: #{tpu_custom_call.1} parent=1 // pred_region
      %80 = dma.done [#allocation4], 16
    $region25: #{tpu_custom_call.1} parent=1 // pred_fallthru
      _
    %81 = vsyncpa [#allocation3], 1
    %82 = vsyncpa [#allocation4], 1
    %83 = vsyncpa [#allocation5], 1

</llo_original>
